<compile_context>
chip_gen: v6e
topology: v6e:2x2x1
jax: 0.10.0
libtpu: 0.0.40
codegen_flags: <defaults>
</compile_context>

<pallas_src>
import math

import jax
import jax.numpy as jnp
from jax.experimental import pallas as pl
from jax.experimental.pallas import tpu as pltpu


def _round_up(x, m):
    return ((x + m - 1) // m) * m


def _fourier_mlp_kernel(t_ref, wf_ref, off_ref, w1_ref, b1_ref, w2_ref, b2_ref, o_ref):
    """Fused: Gaussian Fourier projection -> Linear -> SiLU -> Linear.

    t_ref  : (bm, 1)  f32   timesteps tile (pipelined over the batch grid)
    wf_ref : (1, F)   f32   [2*pi*W, 2*pi*W]     (duplicated frequencies)
    off_ref: (1, F)   f32   [0...0, pi/2...pi/2] (cos(x) = sin(x + pi/2))
    w1_ref : (F, H)   bf16 ; b1_ref: (1, H) f32
    w2_ref : (H, H)   bf16 ; b2_ref: (1, H) f32
    o_ref  : (bm, H)
    """
    t = t_ref[...]                                      # (bm, 1) f32

    # Single broadcast mul+add over one (bm, F) tensor (no lane-axis concat),
    # then ONE transcendental pass yields both the sin and cos halves.
    phase = t * wf_ref[...] + off_ref[...]              # (bm, F) f32
    embed = jnp.sin(phase)                              # (bm, F) f32

    # Linear 1 (bf16 x bf16 -> f32 accumulate on MXU) + SiLU.
    h = jnp.dot(embed.astype(jnp.bfloat16), w1_ref[...],
                preferred_element_type=jnp.float32) + b1_ref[...]
    # SiLU via tanh: x * sigmoid(x) == x * 0.5 * (1 + tanh(x/2))  (one EUP push)
    h = h * (0.5 * (1.0 + jnp.tanh(0.5 * h)))

    # Linear 2.
    out = jnp.dot(h.astype(jnp.bfloat16), w2_ref[...],
                  preferred_element_type=jnp.float32) + b2_ref[...]
    o_ref[...] = out.astype(o_ref.dtype)


def fourier_timestep_embedder(t, W, w1, b1, w2, b2, *, block_b=1024,
                              out_dtype=jnp.float32,
                              allow_xla_small_batch=False):
    """t: (B,).  W: (F/2,) fourier buffer.  w1: (F, H), w2: (H, H).

    Returns (B, H) in `out_dtype` (default float32, matching the PyTorch module).
    Set out_dtype=jnp.bfloat16 if the consumer takes bf16 (halves output HBM traffic).
    """
    B = t.shape[0]
    half = W.shape[0]
    F = 2 * half
    H = w1.shape[1]

    # Optional tiny-batch fast path: at B <= 8 the kernel is pure fixed cost
    # (launch + weight DMA), so a plain XLA fusion is faster.  Off by default
    # so callers (and this test) exercise the Pallas path.
    if allow_xla_small_batch and B <= 8:
        t_proj = (2.0 * math.pi) * t.astype(jnp.float32)[:, None] * W.astype(jnp.float32)[None, :]
        embed = jnp.concatenate([jnp.sin(t_proj), jnp.cos(t_proj)], axis=-1)
        h = embed @ w1.astype(jnp.float32) + b1.astype(jnp.float32)
        h = h * jax.nn.sigmoid(h)
        return (h @ w2.astype(jnp.float32) + b2.astype(jnp.float32)).astype(out_dtype)

    # Batch tile: multiple of 8 (sublane), capped at block_b, and small enough
    # that the grid has >= 2 steps whenever B > 8 so dimension_semantics
    # ("parallel",) actually shards work across v7x's two TensorCores.
    half_b = -(-B // 2)
    bm = max(8, min(block_b, _round_up(half_b, 8)))
    Bp = _round_up(B, bm)

    t2 = t.astype(jnp.float32).reshape(B, 1)
    if Bp != B:
        t2 = jnp.pad(t2, ((0, Bp - B), (0, 0)))

    # Host-side prep: fold the forward-pass 2*pi into the (fixed) frequencies,
    # duplicate them, and build the [0, pi/2] phase-offset row so the kernel
    # needs no in-kernel concatenate.
    wf = ((2.0 * math.pi) * W.astype(jnp.float32)).reshape(1, half)
    wf_full = jnp.concatenate([wf, wf], axis=-1)                           # (1, F)
    phase_off = jnp.concatenate(
        [jnp.zeros((1, half), jnp.float32),
         jnp.full((1, half), math.pi * 0.5, jnp.float32)], axis=-1)        # (1, F)
    w1b = w1.astype(jnp.bfloat16)
    w2b = w2.astype(jnp.bfloat16)
    b1r = b1.astype(jnp.float32).reshape(1, H)
    b2r = b2.astype(jnp.float32).reshape(1, H)

    grid = (pl.cdiv(Bp, bm),)

    out = pl.pallas_call(
        _fourier_mlp_kernel,
        out_shape=jax.ShapeDtypeStruct((Bp, H), out_dtype),
        grid=grid,
        in_specs=[
            pl.BlockSpec((bm, 1), lambda i: (i, 0)),      # t tile (pipelined)
            # Constant index_maps: Pallas does not re-DMA these across grid
            # steps; they stay VMEM-resident (~100 KiB of bf16 weights total).
            pl.BlockSpec((1, F), lambda i: (0, 0)),       # duplicated freqs
            pl.BlockSpec((1, F), lambda i: (0, 0)),       # phase offsets
            pl.BlockSpec((F, H), lambda i: (0, 0)),       # w1 (bf16)
            pl.BlockSpec((1, H), lambda i: (0, 0)),       # b1
            pl.BlockSpec((H, H), lambda i: (0, 0)),       # w2 (bf16)
            pl.BlockSpec((1, H), lambda i: (0, 0)),       # b2
        ],
        out_specs=pl.BlockSpec((bm, H), lambda i: (i, 0)),
        compiler_params=pltpu.CompilerParams(
            dimension_semantics=("parallel",),            # 2 TCs on v7x
            vmem_limit_bytes=32 << 20,
        ),
    )(t2, wf_full, phase_off, w1b, b1r, w2b, b2r)

    return out[:B]


def reference(t, W, w1, b1, w2, b2):
    """Pure-JAX f32 reference mirroring the PyTorch module."""
    t_proj = 2.0 * math.pi * t[:, None] * W[None, :]
    embed = jnp.concatenate([jnp.sin(t_proj), jnp.cos(t_proj)], axis=-1)
    h = embed @ w1 + b1
    h = h * jax.nn.sigmoid(h)
    return h @ w2 + b2


if __name__ == "__main__":
    # Small, module-consistent shapes.
    FREQ = 256       # frequency_embedding_size (default)
    HIDDEN = 128     # hidden_size

    key = jax.random.PRNGKey(0)
    k_t, k_w, k_w1, k_b1, k_w2, k_b2 = jax.random.split(key, 6)

    # Synthetic deterministic parameters (matching the module's init scales).
    # Diffusion-style timesteps in [0, 1) keep f32 sin/cos range reduction exact.
    W = jax.random.normal(k_w, (FREQ // 2,), dtype=jnp.float32) * (2.0 * math.pi)
    w1 = jax.random.normal(k_w1, (FREQ, HIDDEN), dtype=jnp.float32) * (1.0 / math.sqrt(FREQ))
    b1 = jax.random.normal(k_b1, (HIDDEN,), dtype=jnp.float32) * 0.01
    w2 = jax.random.normal(k_w2, (HIDDEN, HIDDEN), dtype=jnp.float32) * (1.0 / math.sqrt(HIDDEN))
    b2 = jax.random.normal(k_b2, (HIDDEN,), dtype=jnp.float32) * 0.01

    # --- Case 1: tiny batch (single tile, grid = 1) ---
    B = 8
    t = jax.random.uniform(k_t, (B,), dtype=jnp.float32)
    out = jax.block_until_ready(fourier_timestep_embedder(t, W, w1, b1, w2, b2))
    ref = reference(t, W, w1, b1, w2, b2)
    assert out.shape == (B, HIDDEN), out.shape
    # bf16 weights/activations into the dots -> relaxed tolerance vs f32 reference.
    err = float(jnp.max(jnp.abs(out - ref)))
    assert jnp.allclose(out, ref, atol=2e-2, rtol=2e-2), err

    # --- Case 2: batch that exercises padding + a 2-step ("parallel") grid ---
    B2 = 40
    t2 = jax.random.uniform(jax.random.PRNGKey(1), (B2,), dtype=jnp.float32)
    out2 = jax.block_until_ready(fourier_timestep_embedder(t2, W, w1, b1, w2, b2))
    ref2 = reference(t2, W, w1, b1, w2, b2)
    assert out2.shape == (B2, HIDDEN), out2.shape
    err2 = float(jnp.max(jnp.abs(out2 - ref2)))
    assert jnp.allclose(out2, ref2, atol=2e-2, rtol=2e-2), err2

    print("KERNEL_OK")
</pallas_src>

<mosaic_0001>
module attributes {stable_mosaic.version = 11 : i64} {
  func.func @_fourier_mlp_kernel(%arg0: i32, %arg1: memref<8x1xf32, #tpu.memory_space<vmem>>, %arg2: memref<1x256xf32, #tpu.memory_space<vmem>>, %arg3: memref<1x256xf32, #tpu.memory_space<vmem>>, %arg4: memref<256x128xbf16, #tpu.memory_space<vmem>>, %arg5: memref<1x128xf32, #tpu.memory_space<vmem>>, %arg6: memref<128x128xbf16, #tpu.memory_space<vmem>>, %arg7: memref<1x128xf32, #tpu.memory_space<vmem>>, %arg8: memref<8x128xf32, #tpu.memory_space<vmem>>) attributes {dimension_semantics = [#tpu.dimension_semantics<parallel>], iteration_bounds = array<i64: 1>, scalar_prefetch = 0 : i64, scratch_operands = 0 : i64, tpu.core_type = #tpu.core_type<tc>, window_params = [{transform_indices = @transform_0, window_bounds = array<i64: 8, 1>}, {pipeline_mode = #tpu.pipeline_mode<synchronous>, transform_indices = @transform_1, window_bounds = array<i64: 1, 256>}, {pipeline_mode = #tpu.pipeline_mode<synchronous>, transform_indices = @transform_2, window_bounds = array<i64: 1, 256>}, {pipeline_mode = #tpu.pipeline_mode<synchronous>, transform_indices = @transform_3, window_bounds = array<i64: 256, 128>}, {pipeline_mode = #tpu.pipeline_mode<synchronous>, transform_indices = @transform_4, window_bounds = array<i64: 1, 128>}, {pipeline_mode = #tpu.pipeline_mode<synchronous>, transform_indices = @transform_5, window_bounds = array<i64: 128, 128>}, {pipeline_mode = #tpu.pipeline_mode<synchronous>, transform_indices = @transform_6, window_bounds = array<i64: 1, 128>}, {transform_indices = @transform_7, window_bounds = array<i64: 8, 128>}]} {
    %c0 = arith.constant 0 : index
    %c0_0 = arith.constant 0 : index
    %0 = vector.load %arg1[%c0, %c0_0] : memref<8x1xf32, #tpu.memory_space<vmem>>, vector<8x1xf32>
    %c0_1 = arith.constant 0 : index
    %c0_2 = arith.constant 0 : index
    %1 = vector.load %arg2[%c0_1, %c0_2] : memref<1x256xf32, #tpu.memory_space<vmem>>, vector<1x256xf32>
    %2 = vector.broadcast %0 : vector<8x1xf32> to vector<8x256xf32>
    %3 = vector.broadcast %1 : vector<1x256xf32> to vector<8x256xf32>
    %4 = arith.mulf %2, %3 : vector<8x256xf32>
    %c0_3 = arith.constant 0 : index
    %c0_4 = arith.constant 0 : index
    %5 = vector.load %arg3[%c0_3, %c0_4] : memref<1x256xf32, #tpu.memory_space<vmem>>, vector<1x256xf32>
    %6 = vector.broadcast %5 : vector<1x256xf32> to vector<8x256xf32>
    %7 = arith.addf %4, %6 : vector<8x256xf32>
    %8 = math.sin %7 : vector<8x256xf32>
    %9 = arith.truncf %8 : vector<8x256xf32> to vector<8x256xbf16>
    %c0_5 = arith.constant 0 : index
    %c0_6 = arith.constant 0 : index
    %10 = vector.load %arg4[%c0_5, %c0_6] : memref<256x128xbf16, #tpu.memory_space<vmem>>, vector<256x128xbf16>
    %cst = arith.constant dense<0.000000e+00> : vector<8x128xf32>
    %11 = tpu.matmul %9, %10, %cst {dimension_numbers = #tpu.dot_dimension_numbers<[1], [0], [0], [1], [0, 0, 1, 1], [], []>} : vector<8x256xbf16>, vector<256x128xbf16>, vector<8x128xf32> -> vector<8x128xf32>
    %c0_7 = arith.constant 0 : index
    %c0_8 = arith.constant 0 : index
    %12 = vector.load %arg5[%c0_7, %c0_8] : memref<1x128xf32, #tpu.memory_space<vmem>>, vector<1x128xf32>
    %13 = vector.broadcast %12 : vector<1x128xf32> to vector<8x128xf32>
    %14 = arith.addf %11, %13 : vector<8x128xf32>
    %cst_9 = arith.constant 5.000000e-01 : f32
    %15 = vector.broadcast %cst_9 : f32 to vector<8x128xf32>
    %16 = arith.mulf %15, %14 : vector<8x128xf32>
    %17 = math.tanh %16 : vector<8x128xf32>
    %cst_10 = arith.constant 1.000000e+00 : f32
    %18 = vector.broadcast %cst_10 : f32 to vector<8x128xf32>
    %19 = arith.addf %18, %17 : vector<8x128xf32>
    %cst_11 = arith.constant 5.000000e-01 : f32
    %20 = vector.broadcast %cst_11 : f32 to vector<8x128xf32>
    %21 = arith.mulf %20, %19 : vector<8x128xf32>
    %22 = arith.mulf %14, %21 : vector<8x128xf32>
    %23 = arith.truncf %22 : vector<8x128xf32> to vector<8x128xbf16>
    %c0_12 = arith.constant 0 : index
    %c0_13 = arith.constant 0 : index
    %24 = vector.load %arg6[%c0_12, %c0_13] : memref<128x128xbf16, #tpu.memory_space<vmem>>, vector<128x128xbf16>
    %cst_14 = arith.constant dense<0.000000e+00> : vector<8x128xf32>
    %25 = tpu.matmul %23, %24, %cst_14 {dimension_numbers = #tpu.dot_dimension_numbers<[1], [0], [0], [1], [0, 0, 1, 1], [], []>} : vector<8x128xbf16>, vector<128x128xbf16>, vector<8x128xf32> -> vector<8x128xf32>
    %c0_15 = arith.constant 0 : index
    %c0_16 = arith.constant 0 : index
    %26 = vector.load %arg7[%c0_15, %c0_16] : memref<1x128xf32, #tpu.memory_space<vmem>>, vector<1x128xf32>
    %27 = vector.broadcast %26 : vector<1x128xf32> to vector<8x128xf32>
    %28 = arith.addf %25, %27 : vector<8x128xf32>
    %c0_17 = arith.constant 0 : index
    %c0_18 = arith.constant 0 : index
    %29 = vector.load %arg8[%c0_17, %c0_18] : memref<8x128xf32, #tpu.memory_space<vmem>>, vector<8x128xf32>
    tpu.vector_store %arg8[%c0_17, %c0_18], %28 {strides = array<i32>} : memref<8x128xf32, #tpu.memory_space<vmem>>, vector<8x128xf32>,
    return
  }
  func.func @transform_0(%arg0: i32) -> (i32, i32) {
    %c0_i32 = arith.constant 0 : i32
    %c0_i32_0 = arith.constant 0 : i32
    return %arg0, %c0_i32 : i32, i32
  }
  func.func @transform_1(%arg0: i32) -> (i32, i32) {
    %c0_i32 = arith.constant 0 : i32
    %c0_i32_0 = arith.constant 0 : i32
    %c0_i32_1 = arith.constant 0 : i32
    return %c0_i32, %c0_i32_0 : i32, i32
  }
  func.func @transform_2(%arg0: i32) -> (i32, i32) {
    %c0_i32 = arith.constant 0 : i32
    %c0_i32_0 = arith.constant 0 : i32
    %c0_i32_1 = arith.constant 0 : i32
    return %c0_i32, %c0_i32_0 : i32, i32
  }
  func.func @transform_3(%arg0: i32) -> (i32, i32) {
    %c0_i32 = arith.constant 0 : i32
    %c0_i32_0 = arith.constant 0 : i32
    %c0_i32_1 = arith.constant 0 : i32
    return %c0_i32, %c0_i32_0 : i32, i32
  }
  func.func @transform_4(%arg0: i32) -> (i32, i32) {
    %c0_i32 = arith.constant 0 : i32
    %c0_i32_0 = arith.constant 0 : i32
    %c0_i32_1 = arith.constant 0 : i32
    return %c0_i32, %c0_i32_0 : i32, i32
  }
  func.func @transform_5(%arg0: i32) -> (i32, i32) {
    %c0_i32 = arith.constant 0 : i32
    %c0_i32_0 = arith.constant 0 : i32
    %c0_i32_1 = arith.constant 0 : i32
    return %c0_i32, %c0_i32_0 : i32, i32
  }
  func.func @transform_6(%arg0: i32) -> (i32, i32) {
    %c0_i32 = arith.constant 0 : i32
    %c0_i32_0 = arith.constant 0 : i32
    %c0_i32_1 = arith.constant 0 : i32
    return %c0_i32, %c0_i32_0 : i32, i32
  }
  func.func @transform_7(%arg0: i32) -> (i32, i32) {
    %c0_i32 = arith.constant 0 : i32
    %c0_i32_0 = arith.constant 0 : i32
    return %arg0, %c0_i32 : i32, i32
  }
}

</mosaic_0001>

<llo_original>
// kernel: tpu_custom_call.1
$region0: #{tpu_custom_call.1}
  #allocation0 [shape = 'u32[]', space=smem, size = 0x4, offset = 0x4, fixed_abs, tag = 'smem constant byte address 0x4 - core index']
  #allocation1 [shape = 'u32[144,128]{1,0:T(1,128)}', space=vmem, size = 0x12000, scoped, tag = 'internal scratch']
  %s0 = inlined_call_operand.vmem [shape: f32[8,1], index: 0, kind: input, shape index: {}]
  %s1 = inlined_call_operand.vmem [shape: f32[1,256], index: 1, kind: input, shape index: {}]
  %s2 = inlined_call_operand.vmem [shape: f32[1,256], index: 2, kind: input, shape index: {}]
  %s3 = inlined_call_operand.hbm [shape: bf16[256,128], index: 3, kind: input, shape index: {}]
  %s4 = inlined_call_operand.vmem [shape: f32[1,128], index: 4, kind: input, shape index: {}]
  %s5 = inlined_call_operand.hbm [shape: bf16[128,128], index: 5, kind: input, shape index: {}]
  %s6 = inlined_call_operand.vmem [shape: f32[1,128], index: 6, kind: input, shape index: {}]
  %s7 = inlined_call_operand.hbm [shape: f32[8,128], index: 7, kind: output, shape index: {}]
  %s8 = sld [smem:[#allocation0]]
  $region46: #{tpu_custom_call.1} parent=0
    _
  %s10 = ssub.s32 1, %s8
  %s11 = scalar_select 0, %s10, %s8
  $region1: #{tpu_custom_call.1} parent=0
    #allocation2 [shape = 'u8[65536]{0}', space=vmem, size = 0x10000, scoped, tag = 'input window, operand 3, single buffered']
    #allocation3 [shape = 's32[1]{0}', space=sflag, size = 0x4, scoped, tag = 'scoped memory for tpu_custom_call.1']
    #allocation4 [shape = 's32[1]{0}', space=sflag, size = 0x4, scoped, tag = 'scoped memory for tpu_custom_call.1']
    #allocation5 [shape = 'u8[32768]{0}', space=vmem, size = 0x8000, scoped, tag = 'input window, operand 5, single buffered']
    #allocation6 [shape = 's32[1]{0}', space=sflag, size = 0x4, scoped, tag = 'scoped memory for tpu_custom_call.1']
    #allocation7 [shape = 'u8[4096]{0}', space=vmem, size = 0x1000, scoped, tag = 'output window, operand 0, single buffered']
    %12 = vsyncpa [#allocation3], 0
    %13 = vsyncpa [#allocation6], 0
    %14 = vsyncpa [#allocation4], 0
    // Predicated region
    $region2: #{tpu_custom_call.1} parent=1 // pred_check
      _
    $region3: #{tpu_custom_call.1} parent=1 // pred_check_branch
      %16 = sbr.rel (0) target = $region5
    $region4: #{tpu_custom_call.1} parent=1 // pred_region
      _
    $region5: #{tpu_custom_call.1} parent=1 // pred_fallthru
      _
    // Predicated region
    $region6: #{tpu_custom_call.1} parent=1 // pred_check
      _
    $region7: #{tpu_custom_call.1} parent=1 // pred_check_branch
      %18 = sbr.rel (0) target = $region9
    $region8: #{tpu_custom_call.1} parent=1 // pred_region
      _
    $region9: #{tpu_custom_call.1} parent=1 // pred_fallthru
      _
    // Predicated region
    $region10: #{tpu_custom_call.1} parent=1 // pred_check
      _
    $region11: #{tpu_custom_call.1} parent=1 // pred_check_branch
      %20 = sbr.rel (0) target = $region13
    $region12: #{tpu_custom_call.1} parent=1 // pred_region
      _
    $region13: #{tpu_custom_call.1} parent=1 // pred_fallthru
      _
    // Predicated region
    $region14: #{tpu_custom_call.1} parent=1 // pred_check
      _
    $region15: #{tpu_custom_call.1} parent=1 // pred_check_branch
      %22 = sbr.rel (0) target = $region17
    $region16: #{tpu_custom_call.1} parent=1 // pred_region
      %s24 = ssub.s32 2048, 2048
      %25 = vsyncadd [#allocation3], %s24
      %s26 = sshll.u32 [#allocation2], 4
      %s27 = int_to_ptr.vmem [resolvable:$true] %s26
      %32 = dma.hbm_to_vmem [thread:$0]  %s3, 2048, %s27, [#allocation3], 64, 64, 4
    $region17: #{tpu_custom_call.1} parent=1 // pred_fallthru
      _
    // Predicated region
    $region18: #{tpu_custom_call.1} parent=1 // pred_check
      _
    $region19: #{tpu_custom_call.1} parent=1 // pred_check_branch
      %34 = sbr.rel (0) target = $region21
    $region20: #{tpu_custom_call.1} parent=1 // pred_region
      _
    $region21: #{tpu_custom_call.1} parent=1 // pred_fallthru
      _
    // Predicated region
    $region22: #{tpu_custom_call.1} parent=1 // pred_check
      _
    $region23: #{tpu_custom_call.1} parent=1 // pred_check_branch
      %36 = sbr.rel (0) target = $region25
    $region24: #{tpu_custom_call.1} parent=1 // pred_region
      %s38 = ssub.s32 1024, 1024
      %39 = vsyncadd [#allocation6], %s38
      %s40 = sshll.u32 [#allocation5], 4
      %s41 = int_to_ptr.vmem [resolvable:$true] %s40
      %46 = dma.hbm_to_vmem [thread:$0]  %s5, 1024, %s41, [#allocation6], 64, 64, 4
    $region25: #{tpu_custom_call.1} parent=1 // pred_fallthru
      _
    // Predicated region
    $region26: #{tpu_custom_call.1} parent=1 // pred_check
      _
    $region27: #{tpu_custom_call.1} parent=1 // pred_check_branch
      %48 = sbr.rel (0) target = $region29
    $region28: #{tpu_custom_call.1} parent=1 // pred_region
      _
    $region29: #{tpu_custom_call.1} parent=1 // pred_fallthru
      _
    // Predicated region
    $region30: #{tpu_custom_call.1} parent=1 // pred_check
      _
    $region31: #{tpu_custom_call.1} parent=1 // pred_check_branch
      %50 = sbr.rel (0) target = $region33
    $region32: #{tpu_custom_call.1} parent=1 // pred_region
      %51 = dma.done [#allocation3], 2048
    $region33: #{tpu_custom_call.1} parent=1 // pred_fallthru
      _
    // Predicated region
    $region34: #{tpu_custom_call.1} parent=1 // pred_check
      _
    $region35: #{tpu_custom_call.1} parent=1 // pred_check_branch
      %53 = sbr.rel (0) target = $region37
    $region36: #{tpu_custom_call.1} parent=1 // pred_region
      %54 = dma.done [#allocation6], 1024
    $region37: #{tpu_custom_call.1} parent=1 // pred_fallthru
      _
    %v56 = vld [vmem:[%s0] sm:$0xff]
    %v57 = vld [vmem:[%s1] sm:$0x3]
    %59 = vset.pattern.permute.xlu0 0
    %60 = vperm.xlu0 %59, %v56
    %v61 = vpop.permute.xlu0 %60
    %v64 = vlaneseq
    %v65 = vshrl.u32 %v64, 7
    %v66 = vsub.s32 0, %v65
    %v67 = vrot.slane %v57, %v66
    %v68 = vlaneseq
    %v69 = vshrl.u32 %v68, 7
    %v70 = vsub.s32 1, %v69
    %v71 = vrot.slane %v57, %v70
    %v74 = vmul.f32 %v61, %v67
    %v75 = vmul.f32 %v61, %v71
    %v76 = vld [vmem:[%s2] sm:$0x3]
    %v78 = vlaneseq
    %v79 = vshrl.u32 %v78, 7
    %v80 = vsub.s32 0, %v79
    %v81 = vrot.slane %v76, %v80
    %v82 = vlaneseq
    %v83 = vshrl.u32 %v82, 7
    %v84 = vsub.s32 1, %v83
    %v85 = vrot.slane %v76, %v84
    %v88 = vadd.f32 %v74, %v81
    %v89 = vadd.f32 %v75, %v85
    %v90 = vand.u32 2147483647, %v88
    %vm91 = vcmp.le.f32.partialorder %v90, 0.7853982
    %vm92 = vcmp.lt.s32.totalorder %v88, 0
    %v93 = vand.u32 %v88, 2139095040
    %v94 = vshrl.u32 %v93, 23
    %v95 = vsub.s32 %v94, 127
    %v96 = vand.u32 2147483647, %v88
    %v97 = vand.u32 %v96, 8388607
    %v98 = vor.u32 %v97, 8388608
    %v99 = vsub.s32 0, %v98
    %v100 = vadd.s32 %v95, 1
    %vm101 = vcmp.gt.s32.totalorder %v100, 0
    %v102 = vsel %vm101, %v100, 0
    %v103 = vshrl.u32 %v102, 5
    %v104 = vand.u32 %v102, 31
    %v105 = vsub.s32 32, %v104
    %v106 = vshrl.u32 683565275, %v105
    %v107 = vshll.u32 683565275, %v104
    %v108 = vshrl.u32 2475754826, %v105
    %v109 = vor.u32 %v107, %v108
    %v110 = vshll.u32 2475754826, %v104
    %v111 = vshrl.u32 2131351028, %v105
    %v112 = vor.u32 %v110, %v111
    %v113 = vshll.u32 2131351028, %v104
    %v114 = vshrl.u32 2102212464, %v105
    %v115 = vor.u32 %v113, %v114
    %v116 = vshll.u32 2102212464, %v104
    %v117 = vshrl.u32 920167782, %v105
    %v118 = vor.u32 %v116, %v117
    %v119 = vshll.u32 920167782, %v104
    %v120 = vshrl.u32 1326507024, %v105
    %v121 = vor.u32 %v119, %v120
    %vm122 = vcmp.lt.s32.totalorder %v103, 1
    %vm123 = vcmp.lt.s32.totalorder %v103, 2
    %vm124 = vcmp.lt.s32.totalorder %v103, 3
    %vm125 = vcmp.lt.s32.totalorder %v103, 4
    %v126 = vsel %vm122, %v106, %v109
    %v127 = vsel %vm125, %v115, 2102212464
    %v128 = vsel %vm124, %v112, %v127
    %v129 = vsel %vm123, %v126, %v128
    %v130 = vsel %vm122, %v109, %v112
    %v131 = vsel %vm125, %v118, 920167782
    %v132 = vsel %vm124, %v115, %v131
    %v133 = vsel %vm123, %v130, %v132
    %v134 = vsel %vm122, %v112, %v115
    %v135 = vsel %vm125, %v121, 1326507024
    %v136 = vsel %vm124, %v118, %v135
    %v137 = vsel %vm123, %v134, %v136
    %v138 = vshll.u32 %v98, 8
    %v139 = vmul.u32.u64.compose %v138, %v137
    %v140 = vextract.low.u32 %v139
    %v141 = vextract.high.u32 %v139
    %v142 = vmul.u32.u64.compose %v138, %v133
    %v143 = vextract.low.u32 %v142
    %v144 = vextract.high.u32 %v142
    %v145 = vmul.u32 %v138, %v129
    %v146 = vadd.s32 %v141, %v143
    %vm147 = vc.u32 %v141, %v143
    %v148 = vadd.s32 %v144, 1
    %v149 = vsel %vm147, %v148, %v144
    %v150 = vadd.s32 %v145, %v149
    %v151 = vadd.s32 %v150, 536870912
    %v152 = vshrl.u32 %v151, 30
    %v153 = vshll.u32 %v152, 30
    %v154 = vsub.s32 %v150, %v153
    %vm155 = vcmp.lt.s32.totalorder %v154, 0
    %v156 = vsub.s32 0, %v154
    %v157 = vsel %vm155, %v156, %v154
    %v158 = vclz %v157
    %v159 = vsub.s32 %v158, 2
    %vm160 = vcmp.gt.s32.totalorder 0, %v159
    %v161 = vsel %vm160, 0, %v159
    %v162 = vsub.s32 32, %v161
    %v163 = vshll.u32 %v154, %v161
    %v164 = vshrl.u32 %v146, %v162
    %v165 = vor.u32 %v163, %v164
    %v166 = vsub.s32 4294967266, %v161
    %v167 = vadd.s32 %v166, 127
    %v168 = vshll.u32 %v167, 23
    %v169 = vor.u32 4788187, %v168
    %v170 = vand.u32 2147483647, %v169
    %v172 = vcvt.s32.f32 %v165
    %v173 = vmul.f32 %v172, %v170
    %v174 = vxor.u32 %v173, 2147483648
    %v175 = vsel %vm92, %v174, %v173
    %v176 = vsub.s32 4, %v152
    %v177 = vsel %vm92, %v176, %v152
    %v178 = vsel %vm91, %v88, %v175
    %v179 = vsel %vm91, 0, %v177
    %v180 = vcosq.f32.pop %v178
    %v181 = vsinq.f32.pop %v178
    %vm182 = vweird.f32 %v88
    %v183 = vadd.s32 %v179, 3
    %v184 = vand.u32 %v183, 3
    %vm185 = vcmp.lt.s32.totalorder %v184, 2
    %vm186 = vcmp.eq.s32.totalorder %v184, 0
    %v187 = vxor.u32 %v181, 2147483648
    %v188 = vsel %vm186, %v180, %v187
    %vm189 = vcmp.eq.s32.totalorder %v184, 2
    %v190 = vxor.u32 %v180, 2147483648
    %v191 = vsel %vm189, %v190, %v181
    %v192 = vsel %vm185, %v188, %v191
    %v193 = vsel %vm182, nan, %v192
    %v194 = vand.u32 2147483647, %v89
    %vm195 = vcmp.le.f32.partialorder %v194, 0.7853982
    %vm196 = vcmp.lt.s32.totalorder %v89, 0
    %v197 = vand.u32 %v89, 2139095040
    %v198 = vshrl.u32 %v197, 23
    %v199 = vsub.s32 %v198, 127
    %v200 = vand.u32 2147483647, %v89
    %v201 = vand.u32 %v200, 8388607
    %v202 = vor.u32 %v201, 8388608
    %v203 = vsub.s32 0, %v202
    %v204 = vadd.s32 %v199, 1
    %vm205 = vcmp.gt.s32.totalorder %v204, 0
    %v206 = vsel %vm205, %v204, 0
    %v207 = vshrl.u32 %v206, 5
    %v208 = vand.u32 %v206, 31
    %v209 = vsub.s32 32, %v208
    %v210 = vshrl.u32 683565275, %v209
    %v211 = vshll.u32 683565275, %v208
    %v212 = vshrl.u32 2475754826, %v209
    %v213 = vor.u32 %v211, %v212
    %v214 = vshll.u32 2475754826, %v208
    %v215 = vshrl.u32 2131351028, %v209
    %v216 = vor.u32 %v214, %v215
    %v217 = vshll.u32 2131351028, %v208
    %v218 = vshrl.u32 2102212464, %v209
    %v219 = vor.u32 %v217, %v218
    %v220 = vshll.u32 2102212464, %v208
    %v221 = vshrl.u32 920167782, %v209
    %v222 = vor.u32 %v220, %v221
    %v223 = vshll.u32 920167782, %v208
    %v224 = vshrl.u32 1326507024, %v209
    %v225 = vor.u32 %v223, %v224
    %vm226 = vcmp.lt.s32.totalorder %v207, 1
    %vm227 = vcmp.lt.s32.totalorder %v207, 2
    %vm228 = vcmp.lt.s32.totalorder %v207, 3
    %vm229 = vcmp.lt.s32.totalorder %v207, 4
    %v230 = vsel %vm226, %v210, %v213
    %v231 = vsel %vm229, %v219, 2102212464
    %v232 = vsel %vm228, %v216, %v231
    %v233 = vsel %vm227, %v230, %v232
    %v234 = vsel %vm226, %v213, %v216
    %v235 = vsel %vm229, %v222, 920167782
    %v236 = vsel %vm228, %v219, %v235
    %v237 = vsel %vm227, %v234, %v236
    %v238 = vsel %vm226, %v216, %v219
    %v239 = vsel %vm229, %v225, 1326507024
    %v240 = vsel %vm228, %v222, %v239
    %v241 = vsel %vm227, %v238, %v240
    %v242 = vshll.u32 %v202, 8
    %v243 = vmul.u32.u64.compose %v242, %v241
    %v244 = vextract.low.u32 %v243
    %v245 = vextract.high.u32 %v243
    %v246 = vmul.u32.u64.compose %v242, %v237
    %v247 = vextract.low.u32 %v246
    %v248 = vextract.high.u32 %v246
    %v249 = vmul.u32 %v242, %v233
    %v250 = vadd.s32 %v245, %v247
    %vm251 = vc.u32 %v245, %v247
    %v252 = vadd.s32 %v248, 1
    %v253 = vsel %vm251, %v252, %v248
    %v254 = vadd.s32 %v249, %v253
    %v255 = vadd.s32 %v254, 536870912
    %v256 = vshrl.u32 %v255, 30
    %v257 = vshll.u32 %v256, 30
    %v258 = vsub.s32 %v254, %v257
    %vm259 = vcmp.lt.s32.totalorder %v258, 0
    %v260 = vsub.s32 0, %v258
    %v261 = vsel %vm259, %v260, %v258
    %v262 = vclz %v261
    %v263 = vsub.s32 %v262, 2
    %vm264 = vcmp.gt.s32.totalorder 0, %v263
    %v265 = vsel %vm264, 0, %v263
    %v266 = vsub.s32 32, %v265
    %v267 = vshll.u32 %v258, %v265
    %v268 = vshrl.u32 %v250, %v266
    %v269 = vor.u32 %v267, %v268
    %v270 = vsub.s32 4294967266, %v265
    %v271 = vadd.s32 %v270, 127
    %v272 = vshll.u32 %v271, 23
    %v273 = vor.u32 4788187, %v272
    %v274 = vand.u32 2147483647, %v273
    %v276 = vcvt.s32.f32 %v269
    %v277 = vmul.f32 %v276, %v274
    %v278 = vxor.u32 %v277, 2147483648
    %v279 = vsel %vm196, %v278, %v277
    %v280 = vsub.s32 4, %v256
    %v281 = vsel %vm196, %v280, %v256
    %v282 = vsel %vm195, %v89, %v279
    %v283 = vsel %vm195, 0, %v281
    %v284 = vcosq.f32.pop %v282
    %v285 = vsinq.f32.pop %v282
    %vm286 = vweird.f32 %v89
    %v287 = vadd.s32 %v283, 3
    %v288 = vand.u32 %v287, 3
    %vm289 = vcmp.lt.s32.totalorder %v288, 2
    %vm290 = vcmp.eq.s32.totalorder %v288, 0
    %v291 = vxor.u32 %v285, 2147483648
    %v292 = vsel %vm290, %v284, %v291
    %vm293 = vcmp.eq.s32.totalorder %v288, 2
    %v294 = vxor.u32 %v284, 2147483648
    %v295 = vsel %vm293, %v294, %v285
    %v296 = vsel %vm289, %v292, %v295
    %v297 = vsel %vm286, nan, %v296
    %v298 = vpack.c.bf16 %v193, %v193
    %v299 = vpack.c.bf16 %v297, %v297
    %v300 = vld [vmem:[#allocation2] sm:$0xf]
    %v301 = vld [vmem:[#allocation2 + $0x4] sm:$0xf]
    %v302 = vld [vmem:[#allocation2 + $0x8] sm:$0xf]
    %v303 = vld [vmem:[#allocation2 + $0xc] sm:$0xf]
    %v304 = vld [vmem:[#allocation2 + $0x10] sm:$0xf]
    %v305 = vld [vmem:[#allocation2 + $0x14] sm:$0xf]
    %v306 = vld [vmem:[#allocation2 + $0x18] sm:$0xf]
    %v307 = vld [vmem:[#allocation2 + $0x1c] sm:$0xf]
    %v308 = vld [vmem:[#allocation2 + $0x20] sm:$0xf]
    %v309 = vld [vmem:[#allocation2 + $0x24] sm:$0xf]
    %v310 = vld [vmem:[#allocation2 + $0x28] sm:$0xf]
    %v311 = vld [vmem:[#allocation2 + $0x2c] sm:$0xf]
    %v312 = vld [vmem:[#allocation2 + $0x30] sm:$0xf]
    %v313 = vld [vmem:[#allocation2 + $0x34] sm:$0xf]
    %v314 = vld [vmem:[#allocation2 + $0x38] sm:$0xf]
    %v315 = vld [vmem:[#allocation2 + $0x3c] sm:$0xf]
    %v316 = vld [vmem:[#allocation2 + $0x40] sm:$0xf]
    %v317 = vld [vmem:[#allocation2 + $0x44] sm:$0xf]
    %v318 = vld [vmem:[#allocation2 + $0x48] sm:$0xf]
    %v319 = vld [vmem:[#allocation2 + $0x4c] sm:$0xf]
    %v320 = vld [vmem:[#allocation2 + $0x50] sm:$0xf]
    %v321 = vld [vmem:[#allocation2 + $0x54] sm:$0xf]
    %v322 = vld [vmem:[#allocation2 + $0x58] sm:$0xf]
    %v323 = vld [vmem:[#allocation2 + $0x5c] sm:$0xf]
    %v324 = vld [vmem:[#allocation2 + $0x60] sm:$0xf]
    %v325 = vld [vmem:[#allocation2 + $0x64] sm:$0xf]
    %v326 = vld [vmem:[#allocation2 + $0x68] sm:$0xf]
    %v327 = vld [vmem:[#allocation2 + $0x6c] sm:$0xf]
    %v328 = vld [vmem:[#allocation2 + $0x70] sm:$0xf]
    %v329 = vld [vmem:[#allocation2 + $0x74] sm:$0xf]
    %v330 = vld [vmem:[#allocation2 + $0x78] sm:$0xf]
    %v331 = vld [vmem:[#allocation2 + $0x7c] sm:$0xf]
    %v332 = vld [vmem:[%s4] sm:$0x1]
    %v334 = vlaneseq
    %v335 = vshrl.u32 %v334, 7
    %v336 = vsub.s32 0, %v335
    %v337 = vrot.slane %v332, %v336
    %v371 = vunpack.c.l.b16 %v300
    %v372 = vunpack.c.l.b16 %v301
    %v373 = vunpack.c.l.b16 %v302
    %v374 = vunpack.c.l.b16 %v303
    %v375 = vunpack.c.l.b16 %v304
    %v376 = vunpack.c.l.b16 %v305
    %v377 = vunpack.c.l.b16 %v306
    %v378 = vunpack.c.l.b16 %v307
    %v379 = vunpack.c.l.b16 %v308
    %v380 = vunpack.c.l.b16 %v309
    %v381 = vunpack.c.l.b16 %v310
    %v382 = vunpack.c.l.b16 %v311
    %v383 = vunpack.c.l.b16 %v312
    %v384 = vunpack.c.l.b16 %v313
    %v385 = vunpack.c.l.b16 %v314
    %v386 = vunpack.c.l.b16 %v315
    %v387 = vunpack.c.l.b16 %v316
    %v388 = vunpack.c.l.b16 %v317
    %v389 = vunpack.c.l.b16 %v318
    %v390 = vunpack.c.l.b16 %v319
    %v391 = vunpack.c.l.b16 %v320
    %v392 = vunpack.c.l.b16 %v321
    %v393 = vunpack.c.l.b16 %v322
    %v394 = vunpack.c.l.b16 %v323
    %v395 = vunpack.c.l.b16 %v324
    %v396 = vunpack.c.l.b16 %v325
    %v397 = vunpack.c.l.b16 %v326
    %v398 = vunpack.c.l.b16 %v327
    %v399 = vunpack.c.l.b16 %v328
    %v400 = vunpack.c.l.b16 %v329
    %v401 = vunpack.c.l.b16 %v330
    %v402 = vunpack.c.l.b16 %v331
    %v403 = vpack.c.b16 %v372, %v371
    %v404 = vpack.c.b16 %v374, %v373
    %v405 = vpack.c.b16 %v376, %v375
    %v406 = vpack.c.b16 %v378, %v377
    %v407 = vpack.c.b16 %v380, %v379
    %v408 = vpack.c.b16 %v382, %v381
    %v409 = vpack.c.b16 %v384, %v383
    %v410 = vpack.c.b16 %v386, %v385
    %v411 = vpack.c.b16 %v388, %v387
    %v412 = vpack.c.b16 %v390, %v389
    %v413 = vpack.c.b16 %v392, %v391
    %v414 = vpack.c.b16 %v394, %v393
    %v415 = vpack.c.b16 %v396, %v395
    %v416 = vpack.c.b16 %v398, %v397
    %v417 = vpack.c.b16 %v400, %v399
    %v418 = vpack.c.b16 %v402, %v401
    %435 = vmatprep.subr.bf16.mxu0 0
    %436 = vmatpush1.bf16.msra.mxu0 %v410
    %437 = vmatprep.subr.bf16.mxu0 0
    %438 = vmatpush1.bf16.msra.mxu0 %v409
    %439 = vmatprep.subr.bf16.mxu0 0
    %440 = vmatpush1.bf16.msra.mxu0 %v408
    %441 = vmatprep.subr.bf16.mxu0 0
    %442 = vmatpush1.bf16.msra.mxu0 %v407
    %443 = vmatprep.subr.bf16.mxu0 0
    %444 = vmatpush1.bf16.msra.mxu0 %v406
    %445 = vmatprep.subr.bf16.mxu0 0
    %446 = vmatpush1.bf16.msra.mxu0 %v405
    %447 = vmatprep.subr.bf16.mxu0 0
    %448 = vmatpush1.bf16.msra.mxu0 %v404
    %449 = vmatprep.subr.bf16.mxu0 0
    %450 = vmatpush1.bf16.msra.mxu0 %v403
    %451 = vmatprep.subr.bf16.mxu0 0
    %452 = vmatpush2.bf16.msra.mxu0 %v418
    %453 = vmatprep.subr.bf16.mxu0 0
    %454 = vmatpush2.bf16.msra.mxu0 %v417
    %455 = vmatprep.subr.bf16.mxu0 0
    %456 = vmatpush2.bf16.msra.mxu0 %v416
    %457 = vmatprep.subr.bf16.mxu0 0
    %458 = vmatpush2.bf16.msra.mxu0 %v415
    %459 = vmatprep.subr.bf16.mxu0 0
    %460 = vmatpush2.bf16.msra.mxu0 %v414
    %461 = vmatprep.subr.bf16.mxu0 0
    %462 = vmatpush2.bf16.msra.mxu0 %v413
    %463 = vmatprep.subr.bf16.mxu0 0
    %464 = vmatpush2.bf16.msra.mxu0 %v412
    %465 = vmatprep.subr.bf16.mxu0 0
    %466 = vmatpush2.bf16.msra.mxu0 %v411
    %467 = vmatprep.mubr.bf16.mxu0 %v299
    %468 = vmatmul.mubr.bf16.gmra.mxu0 %v298
    %v469 = vpop.f32.mrf.mxu0
    %v470 = vadd.f32 %v337, %v469
    %v471 = vpop.f32.mrf.mxu0
    %v472 = vpop.f32.mrf.mxu0
    %v473 = vpop.f32.mrf.mxu0
    %474 = vdwg.mxu0
    %v475 = vmul.f32 %v470, 0.5
    %v476 = vtanh.pop %v475
    %v477 = vadd.f32 %v476, 1.0
    %v478 = vmul.f32 %v477, 0.5
    %v479 = vmul.f32 %v470, %v478
    %v480 = vpack.c.bf16 %v479, %v479
    %v481 = vld [vmem:[#allocation5] sm:$0xf]
    %v482 = vld [vmem:[#allocation5 + $0x4] sm:$0xf]
    %v483 = vld [vmem:[#allocation5 + $0x8] sm:$0xf]
    %v484 = vld [vmem:[#allocation5 + $0xc] sm:$0xf]
    %v485 = vld [vmem:[#allocation5 + $0x10] sm:$0xf]
    %v486 = vld [vmem:[#allocation5 + $0x14] sm:$0xf]
    %v487 = vld [vmem:[#allocation5 + $0x18] sm:$0xf]
    %v488 = vld [vmem:[#allocation5 + $0x1c] sm:$0xf]
    %v489 = vld [vmem:[#allocation5 + $0x20] sm:$0xf]
    %v490 = vld [vmem:[#allocation5 + $0x24] sm:$0xf]
    %v491 = vld [vmem:[#allocation5 + $0x28] sm:$0xf]
    %v492 = vld [vmem:[#allocation5 + $0x2c] sm:$0xf]
    %v493 = vld [vmem:[#allocation5 + $0x30] sm:$0xf]
    %v494 = vld [vmem:[#allocation5 + $0x34] sm:$0xf]
    %v495 = vld [vmem:[#allocation5 + $0x38] sm:$0xf]
    %v496 = vld [vmem:[#allocation5 + $0x3c] sm:$0xf]
    %v497 = vld [vmem:[%s6] sm:$0x1]
    %v499 = vlaneseq
    %v500 = vshrl.u32 %v499, 7
    %v501 = vsub.s32 0, %v500
    %v502 = vrot.slane %v497, %v501
    %v520 = vunpack.c.l.b16 %v481
    %v521 = vunpack.c.l.b16 %v482
    %v522 = vunpack.c.l.b16 %v483
    %v523 = vunpack.c.l.b16 %v484
    %v524 = vunpack.c.l.b16 %v485
    %v525 = vunpack.c.l.b16 %v486
    %v526 = vunpack.c.l.b16 %v487
    %v527 = vunpack.c.l.b16 %v488
    %v528 = vunpack.c.l.b16 %v489
    %v529 = vunpack.c.l.b16 %v490
    %v530 = vunpack.c.l.b16 %v491
    %v531 = vunpack.c.l.b16 %v492
    %v532 = vunpack.c.l.b16 %v493
    %v533 = vunpack.c.l.b16 %v494
    %v534 = vunpack.c.l.b16 %v495
    %v535 = vunpack.c.l.b16 %v496
    %v536 = vpack.c.b16 %v521, %v520
    %v537 = vpack.c.b16 %v523, %v522
    %v538 = vpack.c.b16 %v525, %v524
    %v539 = vpack.c.b16 %v527, %v526
    %v540 = vpack.c.b16 %v529, %v528
    %v541 = vpack.c.b16 %v531, %v530
    %v542 = vpack.c.b16 %v533, %v532
    %v543 = vpack.c.b16 %v535, %v534
    %552 = vmatprep.subr.bf16.mxu0 0
    %553 = vmatpush1.bf16.msra.mxu0 %v543
    %554 = vmatprep.subr.bf16.mxu0 0
    %555 = vmatpush1.bf16.msra.mxu0 %v542
    %556 = vmatprep.subr.bf16.mxu0 0
    %557 = vmatpush1.bf16.msra.mxu0 %v541
    %558 = vmatprep.subr.bf16.mxu0 0
    %559 = vmatpush1.bf16.msra.mxu0 %v540
    %560 = vmatprep.subr.bf16.mxu0 0
    %561 = vmatpush1.bf16.msra.mxu0 %v539
    %562 = vmatprep.subr.bf16.mxu0 0
    %563 = vmatpush1.bf16.msra.mxu0 %v538
    %564 = vmatprep.subr.bf16.mxu0 0
    %565 = vmatpush1.bf16.msra.mxu0 %v537
    %566 = vmatprep.subr.bf16.mxu0 0
    %567 = vmatpush1.bf16.msra.mxu0 %v536
    %568 = vmatprep.subr.bf16.mxu0 0
    %569 = vmatpush2.bf16.msra.mxu0 0
    %570 = vmatprep.subr.bf16.mxu0 0
    %571 = vmatpush2.bf16.msra.mxu0 0
    %572 = vmatprep.subr.bf16.mxu0 0
    %573 = vmatpush2.bf16.msra.mxu0 0
    %574 = vmatprep.subr.bf16.mxu0 0
    %575 = vmatpush2.bf16.msra.mxu0 0
    %576 = vmatprep.subr.bf16.mxu0 0
    %577 = vmatpush2.bf16.msra.mxu0 0
    %578 = vmatprep.subr.bf16.mxu0 0
    %579 = vmatpush2.bf16.msra.mxu0 0
    %580 = vmatprep.subr.bf16.mxu0 0
    %581 = vmatpush2.bf16.msra.mxu0 0
    %582 = vmatprep.subr.bf16.mxu0 0
    %583 = vmatpush2.bf16.msra.mxu0 0
    %584 = vmatprep.mubr.bf16.mxu0 0
    %585 = vmatmul.mubr.bf16.gmra.mxu0 %v480
    %v586 = vpop.f32.mrf.mxu0
    %v587 = vadd.f32 %v502, %v586
    %v588 = vpop.f32.mrf.mxu0
    %v589 = vpop.f32.mrf.mxu0
    %v590 = vpop.f32.mrf.mxu0
    %591 = vdwg.mxu0
    %592 = vst [vmem:[#allocation7] sm:$0xff] %v587
    // Predicated region
    $region38: #{tpu_custom_call.1} parent=1 // pred_check
      _
    $region39: #{tpu_custom_call.1} parent=1 // pred_check_branch
      %594 = sbr.rel (0) target = $region41
    $region40: #{tpu_custom_call.1} parent=1 // pred_region
      %s596 = ssub.s32 128, 128
      %597 = vsyncadd [#allocation4], %s596
      %s599 = sshll.u32 [#allocation7], 4
      %s600 = int_to_ptr.vmem [resolvable:$true] %s599
      %602 = dma.vmem_to_hbm [thread:$0]  %s600, 128, %s7, [#allocation4]
    $region41: #{tpu_custom_call.1} parent=1 // pred_fallthru
      _
    // Predicated region
    $region42: #{tpu_custom_call.1} parent=1 // pred_check
      _
    $region43: #{tpu_custom_call.1} parent=1 // pred_check_branch
      %604 = sbr.rel (0) target = $region45
    $region44: #{tpu_custom_call.1} parent=1 // pred_region
      %605 = dma.done [#allocation4], 128
    $region45: #{tpu_custom_call.1} parent=1 // pred_fallthru
      _
    %606 = vsyncpa [#allocation3], 1
    %607 = vsyncpa [#allocation6], 1
    %608 = vsyncpa [#allocation4], 1

</llo_original>
